<compile_context>
chip_gen: v7x
topology: tpu7x:2x2x1
jax: 0.10.0
libtpu: 0.0.40
codegen_flags: <defaults>
</compile_context>

<pallas_src>
import jax
import jax.numpy as jnp
from jax.experimental import pallas as pl
from jax.experimental.pallas import tpu as pltpu

_EPS = 1e-12        # guard log(0); added after the f32 cast (would flush in bf16)
_MAX_TILE = 4096    # lanes per grid step; multiple of 128, ~C*16 KiB f32 per input block


def _entropy_sum_kernel(x_ref, o_ref):
    """per_class=False path: uncertainty summed over dim=1 (class dim)."""
    x = x_ref[...].astype(jnp.float32)            # (1, C, TILE) -> f32 compute
    u = -x * jnp.log(x + _EPS)                    # measure_uncertainty (VALU + EUP log)
    # dim=1 sum stays a sublane (XLU) reduce -- no MXU formulation needed; the
    # kernel is HBM-bound and no compute slot is near saturation.
    o_ref[...] = jnp.sum(u, axis=1, keepdims=True).astype(o_ref.dtype)


def _entropy_perclass_kernel(x_ref, o_ref):
    """per_class=True path: raw per-class uncertainty."""
    x = x_ref[...].astype(jnp.float32)            # (1, C, TILE)
    o_ref[...] = (-x * jnp.log(x + _EPS)).astype(o_ref.dtype)


def _round_up(n, m):
    return ((n + m - 1) // m) * m


def acquisition_forward(x: jax.Array, per_class: bool = False) -> jax.Array:
    """Pallas equivalent of Acquisition(per_class).forward(x).

    x: [B, C, H, W] class probabilities (NCHW), f32 or bf16.
    Returns [B, H, W] if per_class=False (sum over class dim), else [B, C, H, W].
    """
    B, C, H, W = x.shape
    HW = H * W
    xr = x.reshape(B, C, HW)

    # Lane-dense tiling of the flattened spatial axis.  Pad HW up to a multiple
    # of the tile in the wrapper; zero padding is safe (-0 * log(eps) == 0) and
    # padded lanes are sliced away after the call.
    tile = min(_MAX_TILE, _round_up(HW, 128))
    hw_pad = _round_up(HW, tile)
    if hw_pad != HW:
        xr = jnp.pad(xr, ((0, 0), (0, 0), (0, hw_pad - HW)))

    grid = (B, hw_pad // tile)
    in_spec = pl.BlockSpec((1, C, tile), lambda b, t: (b, 0, t))
    cparams = pltpu.CompilerParams(
        dimension_semantics=("parallel", "parallel"))

    if per_class:
        # TODO(synk): if the caller's `x` is dead after this call, pass
        # input_output_aliases={0: 0} to reuse the HBM buffer (not done here
        # because the test reuses `x` afterwards).
        out = pl.pallas_call(
            _entropy_perclass_kernel,
            out_shape=jax.ShapeDtypeStruct((B, C, hw_pad), x.dtype),
            grid=grid,
            in_specs=[in_spec],
            out_specs=pl.BlockSpec((1, C, tile), lambda b, t: (b, 0, t)),
            compiler_params=cparams,
        )(xr)
        return out[:, :, :HW].reshape(B, C, H, W)

    # TODO(synk): folding 8 batch rows into the sublane dim (block (8, C, tile),
    # output (8, tile)) would give unmasked output stores, but requires B % 8 == 0;
    # output traffic is only 1/C of input so the win is marginal.
    out = pl.pallas_call(
        _entropy_sum_kernel,
        out_shape=jax.ShapeDtypeStruct((B, 1, hw_pad), x.dtype),
        grid=grid,
        in_specs=[in_spec],
        out_specs=pl.BlockSpec((1, 1, tile), lambda b, t: (b, 0, t)),
        compiler_params=cparams,
    )(xr)
    return out[:, 0, :HW].reshape(B, H, W)


def _reference(x: jax.Array, per_class: bool = False) -> jax.Array:
    xf = x.astype(jnp.float32)
    u = (-xf * jnp.log(xf + _EPS)).astype(x.dtype)
    return u if per_class else jnp.sum(u.astype(jnp.float32), axis=1).astype(x.dtype)


if __name__ == "__main__":
    key = jax.random.PRNGKey(0)
    B, C, H, W = 2, 4, 16, 16
    logits = jax.random.normal(key, (B, C, H, W), dtype=jnp.float32)
    probs = jax.nn.softmax(logits, axis=1)  # valid class probabilities, NCHW

    # per_class=False (default): sum over dim=1
    out = acquisition_forward(probs, per_class=False)
    out = jax.block_until_ready(out)
    ref = _reference(probs, per_class=False)
    assert out.shape == (B, H, W), out.shape
    assert jnp.allclose(out, ref, atol=1e-5, rtol=1e-5)

    # per_class=True: raw per-class uncertainty
    out_pc = acquisition_forward(probs, per_class=True)
    out_pc = jax.block_until_ready(out_pc)
    ref_pc = _reference(probs, per_class=True)
    assert out_pc.shape == (B, C, H, W), out_pc.shape
    assert jnp.allclose(out_pc, ref_pc, atol=1e-5, rtol=1e-5)

    # non-lane-aligned spatial size: exercises the wrapper-side zero padding
    key2 = jax.random.PRNGKey(1)
    logits2 = jax.random.normal(key2, (2, 3, 10, 10), dtype=jnp.float32)
    probs2 = jax.nn.softmax(logits2, axis=1)
    out2 = jax.block_until_ready(acquisition_forward(probs2, per_class=False))
    ref2 = _reference(probs2, per_class=False)
    assert out2.shape == (2, 10, 10), out2.shape
    assert jnp.allclose(out2, ref2, atol=1e-5, rtol=1e-5)

    print("KERNEL_OK")
</pallas_src>

<mosaic_0001>
module attributes {stable_mosaic.version = 11 : i64} {
  func.func @_entropy_sum_kernel(%arg0: i32, %arg1: i32, %arg2: memref<1x4x256xf32, #tpu.memory_space<vmem>>, %arg3: memref<1x1x256xf32, #tpu.memory_space<vmem>>) attributes {dimension_semantics = [#tpu.dimension_semantics<parallel>, #tpu.dimension_semantics<parallel>], iteration_bounds = array<i64: 2, 1>, scalar_prefetch = 0 : i64, scratch_operands = 0 : i64, tpu.core_type = #tpu.core_type<tc>, window_params = [{transform_indices = @transform_0, window_bounds = array<i64: 1, 4, 256>}, {transform_indices = @transform_1, window_bounds = array<i64: 1, 1, 256>}]} {
    %c0 = arith.constant 0 : index
    %c0_0 = arith.constant 0 : index
    %c0_1 = arith.constant 0 : index
    %0 = vector.load %arg2[%c0, %c0_0, %c0_1] : memref<1x4x256xf32, #tpu.memory_space<vmem>>, vector<1x4x256xf32>
    %cst = arith.constant 0.000000e+00 : f32
    %1 = vector.broadcast %cst : f32 to vector<1x4x256xf32>
    %2 = arith.subf %1, %0 : vector<1x4x256xf32>
    %cst_2 = arith.constant 9.99999996E-13 : f32
    %3 = vector.broadcast %cst_2 : f32 to vector<1x4x256xf32>
    %4 = arith.addf %0, %3 : vector<1x4x256xf32>
    %5 = math.log %4 : vector<1x4x256xf32>
    %6 = arith.mulf %2, %5 : vector<1x4x256xf32>
    %cst_3 = arith.constant dense<0.000000e+00> : vector<1x256xf32>
    %7 = vector.multi_reduction <add>, %6, %cst_3 [1] : vector<1x4x256xf32> to vector<1x256xf32>
    %8 = vector.shape_cast %7 : vector<1x256xf32> to vector<1x1x256xf32>
    %c0_4 = arith.constant 0 : index
    %c0_5 = arith.constant 0 : index
    %c0_6 = arith.constant 0 : index
    %9 = vector.load %arg3[%c0_4, %c0_5, %c0_6] : memref<1x1x256xf32, #tpu.memory_space<vmem>>, vector<1x1x256xf32>
    tpu.vector_store %arg3[%c0_4, %c0_5, %c0_6], %8 {strides = array<i32>} : memref<1x1x256xf32, #tpu.memory_space<vmem>>, vector<1x1x256xf32>,
    return
  }
  func.func @transform_0(%arg0: i32, %arg1: i32) -> (i32, i32, i32) {
    %c0_i32 = arith.constant 0 : i32
    %c0_i32_0 = arith.constant 0 : i32
    return %arg0, %c0_i32, %arg1 : i32, i32, i32
  }
  func.func @transform_1(%arg0: i32, %arg1: i32) -> (i32, i32, i32) {
    %c0_i32 = arith.constant 0 : i32
    %c0_i32_0 = arith.constant 0 : i32
    return %arg0, %c0_i32, %arg1 : i32, i32, i32
  }
}

</mosaic_0001>

<llo_original>
// kernel: tpu_custom_call.1
$region0: #{tpu_custom_call.1}
  #allocation0 [shape = 'u32[]', space=smem, size = 0x4, offset = 0x4, fixed_abs, tag = 'smem constant byte address 0x4 - core index']
  #allocation1 [shape = 'u32[144,128]{1,0:T(1,128)}', space=vmem, size = 0x12000, scoped, tag = 'internal scratch']
  %s0 = inlined_call_operand.hbm [shape: f32[2,4,256], index: 0, kind: input, shape index: {}]
  %s1 = inlined_call_operand.hbm [shape: f32[2,1,256], index: 1, kind: output, shape index: {}]
  %s2 = sld [smem:[#allocation0]]
  $region41: #{tpu_custom_call.1} parent=0
    _
  %s4 = ssub.s32 1, %s2
  %s5 = scalar_select 0, %s4, %s2
  $region1: #{tpu_custom_call.1} parent=0
    #allocation2 [shape = 'u8[8192]{0}', space=vmem, size = 0x2000, scoped, tag = 'input window, operand 0']
    #allocation3 [shape = 's32[2]{0}', space=sflag, size = 0x8, scoped, tag = 'scoped memory for tpu_custom_call.1']
    #allocation4 [shape = 's32[2]{0}', space=sflag, size = 0x8, scoped, tag = 'scoped memory for tpu_custom_call.1']
    #allocation5 [shape = 'u8[2048]{0}', space=vmem, size = 0x800, scoped, tag = 'output window, operand 0']
    %6 = vsyncpa [#allocation3], 0
    %s7 = scalar_lea.sflag [#allocation3], 1
    %8 = vsyncpa %s7, 0
    %9 = vsyncpa [#allocation4], 0
    %s10 = scalar_lea.sflag [#allocation4], 1
    %11 = vsyncpa %s10, 0
    loop: start=0, step=1, limit=4
    $region2: #{tpu_custom_call.1} parent=1 // loop_pre_header
      _
    $region3: #{tpu_custom_call.1} parent=1 // loop_header
      %s13 = sphi 0, %s17
      %p14 = scmp.ge.s32.totalorder %s13, 4
      %s20 = sphi 0, %s32
      %s21 = sphi 0, %s28
      %s22 = sphi 0, %s20
      %s23 = sphi 0, %s21
      %s24 = sphi 0, %s22
      %s25 = sphi 0, %s23
      %s37 = sphi 0, %s39
      %s40 = sphi 0, %s37
      %s41 = sphi 0, %s40
      %s57 = sphi 0, %s41
      %s65 = sphi 0, %s67
      %s68 = sphi 0, %s65
      %s69 = sphi 0, %s68
      %s85 = sphi 0, %s69
    $region4: #{tpu_custom_call.1} parent=1 // loop_header_branch
      %16 = sbr.rel (%p14) target = $region8
    $region5: #{tpu_custom_call.1} parent=1 // loop_body
      %s18 = ssub.s32 %s13, 1
      %s19 = ssub.s32 %s13, 2
      %s26 = sadd.s32 1, %s21
      %p27 = scmp.ge.s32.totalorder %s26, 1
      %s28 = scalar_select %p27, 0, %s26
      %s29 = sadd.s32 1, %s20
      %s30 = scalar_select %p27, %s29, %s20
      %p31 = scmp.ge.s32.totalorder %s30, 2
      %s32 = scalar_select %p31, 0, %s30
      %s33 = ssub.s32 %s20, %s32
      %s34 = ssub.s32 %s21, %s28
      %s35 = sor.u32 %s33, %s34
      %p36 = scmp.eq.s32.totalorder %s35, 0
      %s38 = sadd.s32 %s37, 1
      %s39 = scalar_select %p36, %s37, %s38
      %p42 = pneg %p36
      %p43 = scmp.eq.s32.totalorder %s13, 1
      %p44 = por %p42, %p43
      %p45 = scmp.ne.s32.totalorder %s37, %s40
      %p46 = scmp.eq.s32.totalorder %s13, 0
      %p47 = por %p45, %p46
      %p48 = scmp.ne.s32.totalorder %s37, %s40
      %p49 = scmp.eq.s32.totalorder %s18, 1
      %p50 = por %p48, %p49
      %p51 = scmp.ne.s32.totalorder %s40, %s41
      %p52 = scmp.eq.s32.totalorder %s18, 0
      %p53 = por %p51, %p52
      %p54 = scmp.ne.s32.totalorder %s40, %s41
      %p55 = scmp.eq.s32.totalorder %s19, 1
      %p56 = por %p54, %p55
      %p58 = scmp.ne.s32.totalorder %s41, %s57
      %p59 = scmp.eq.s32.totalorder %s19, 0
      %p60 = por %p58, %p59
      %s61 = ssub.s32 %s20, %s32
      %s62 = ssub.s32 %s21, %s28
      %s63 = sor.u32 %s61, %s62
      %p64 = scmp.eq.s32.totalorder %s63, 0
      %s66 = sadd.s32 %s65, 1
      %s67 = scalar_select %p64, %s65, %s66
      %p70 = pneg %p64
      %p71 = scmp.eq.s32.totalorder %s13, 1
      %p72 = por %p70, %p71
      %p73 = scmp.ne.s32.totalorder %s65, %s68
      %p74 = scmp.eq.s32.totalorder %s13, 0
      %p75 = por %p73, %p74
      %p76 = scmp.ne.s32.totalorder %s65, %s68
      %p77 = scmp.eq.s32.totalorder %s18, 1
      %p78 = por %p76, %p77
      %p79 = scmp.ne.s32.totalorder %s68, %s69
      %p80 = scmp.eq.s32.totalorder %s18, 0
      %p81 = por %p79, %p80
      %p82 = scmp.ne.s32.totalorder %s68, %s69
      %p83 = scmp.eq.s32.totalorder %s19, 1
      %p84 = por %p82, %p83
      %p86 = scmp.ne.s32.totalorder %s69, %s85
      %p87 = scmp.eq.s32.totalorder %s19, 0
      %p88 = por %p86, %p87
      %p89 = scmp.le.s32.totalorder 1, %s13
      %p90 = scmp.lt.s32.totalorder %s13, 3
      %p91 = pnand %p89, %p90
      %p92 = pneg %p91
      // Predicated region
      $region9: #{tpu_custom_call.1} parent=5 // pred_check
        _
      $region10: #{tpu_custom_call.1} parent=5 // pred_check_branch
        %94 = sbr.rel (%p91) target = $region12
      $region11: #{tpu_custom_call.1} parent=5 // pred_region
        %s95 = ssub.s32 %s13, 1
      $region12: #{tpu_custom_call.1} parent=5 // pred_fallthru
        _
      %p96 = scmp.lt.s32.totalorder %s13, 2
      // Predicated region
      $region13: #{tpu_custom_call.1} parent=5 // pred_check
        %p97 = pneg %p96
      $region14: #{tpu_custom_call.1} parent=5 // pred_check_branch
        %99 = sbr.rel (%p97) target = $region16
      $region15: #{tpu_custom_call.1} parent=5 // pred_region
        // Predicated region
        $region17: #{tpu_custom_call.1} parent=15 // pred_check
          %p100 = pneg %p47
        $region18: #{tpu_custom_call.1} parent=15 // pred_check_branch
          %102 = sbr.rel (%p100) target = $region20
        $region19: #{tpu_custom_call.1} parent=15 // pred_region
          %s103 = sand.u32 %s37, 1
          %s104 = scalar_lea.sflag [#allocation3], %s103
          %s105 = sand.u32 %s37, 1
          %s106 = smul.addr %s105, 8
          %s107 = scalar_lea.vmem [#allocation2], %s106
          %s108 = smul.u32 2, %s21
          %s110 = ssub.s32 128, 128
          %111 = vsyncadd %s104, %s110
          %s112 = smul.addr %s20, 2
          %s113 = sadd.s32 %s108, %s112
          %s114 = smul.addr %s113, 64
          %s115 = scalar_lea.hbm %s0, %s114
          %s117 = sshll.u32 %s107, 4
          %s118 = int_to_ptr.vmem [resolvable:$true] %s117
          %120 = dma.hbm_to_vmem [thread:$0]  %s115, 128, %s118, %s104
        $region20: #{tpu_custom_call.1} parent=15 // pred_fallthru
          _
      $region16: #{tpu_custom_call.1} parent=5 // pred_fallthru
        _
      %p121 = scmp.le.s32.totalorder 1, %s13
      %p122 = scmp.lt.s32.totalorder %s13, 3
      %p123 = pnand %p121, %p122
      %p124 = pneg %p123
      // Predicated region
      $region21: #{tpu_custom_call.1} parent=5 // pred_check
        _
      $region22: #{tpu_custom_call.1} parent=5 // pred_check_branch
        %126 = sbr.rel (%p123) target = $region24
      $region23: #{tpu_custom_call.1} parent=5 // pred_region
        %s127 = ssub.s32 %s13, 1
        %s128 = sand.u32 %s40, 1
        %s129 = scalar_lea.sflag [#allocation3], %s128
        %s130 = sand.u32 %s40, 1
        %s131 = smul.addr %s130, 8
        %s132 = scalar_lea.vmem [#allocation2], %s131
        // Predicated region
        $region25: #{tpu_custom_call.1} parent=23 // pred_check
          %p133 = pneg %p53
        $region26: #{tpu_custom_call.1} parent=23 // pred_check_branch
          %135 = sbr.rel (%p133) target = $region28
        $region27: #{tpu_custom_call.1} parent=23 // pred_region
          %136 = dma.done %s129, 128
        $region28: #{tpu_custom_call.1} parent=23 // pred_fallthru
          _
        %s137 = sand.u32 %s40, 1
        %s138 = scalar_lea.sflag [#allocation3], %s137
        %s139 = sand.u32 %s40, 1
        %s140 = smul.addr %s139, 8
        %s141 = scalar_lea.vmem [#allocation2], %s140
        %p142 = pneg %p53
        %p143 = pneg %p50
        %p144 = pneg %p81
        %p145 = pneg %p78
        %s146 = sand.u32 %s68, 1
        %s147 = scalar_lea.sflag [#allocation4], %s146
        %s148 = sand.u32 %s68, 1
        %s149 = smul.addr %s148, 2
        %s150 = scalar_lea.vmem [#allocation5], %s149
        %s151 = smul.u32 2, %s23
        %s152 = smul.u32 2, %s23
        %v153 = vld [vmem:[%s132] sm:$0xff]
        %v154 = vsub.f32 0.0, %v153
        %v155 = vadd.f32 %v153, 1e-12
        %v156 = vlog2.pop %v155
        %v157 = vmul.f32 %v156, 0.6931472
        %v158 = vmul.f32 %v154, %v157
        %v160 = vcombine.high %v158, %v158
        %vm162 = vcmask 1043456
        %v163 = vsel %vm162, %v158, 0.0
        %v164 = vrot.slane %v163, 4
        %v165 = vadd.f32 %v163, %v164
        %v166 = vrot.slane %v165, 2
        %v167 = vadd.f32 %v165, %v166
        %v168 = vrot.slane %v167, 1
        %v169 = vadd.f32 %v167, %v168
        %v170 = vsel %vm162, %v160, 0.0
        %v171 = vrot.slane %v170, 4
        %v172 = vadd.f32 %v170, %v171
        %v173 = vrot.slane %v172, 2
        %v174 = vadd.f32 %v172, %v173
        %v175 = vrot.slane %v174, 1
        %v176 = vadd.f32 %v174, %v175
        %v179 = vcombine.low %v169, %v176
        %v181 = vunpack.c.l.s4 1966171168
        %v182 = vunpack.c.0.s8 %v181
        %v183 = vlaneseq
        %v184 = vshrl.u32 %v183, 7
        %v185 = vsub.s32 %v182, %v184
        %v186 = vrot.slane %v179, %v185
        %v188 = vunpack.c.l.s4 1966171168
        %v189 = vunpack.c.0.s8 %v188
        %v190 = vlaneseq
        %v191 = vshrl.u32 %v190, 7
        %v192 = vsub.s32 %v189, %v191
        %v193 = vrot.slane %v186, %v192
        %v195 = vlaneseq
        %vm196 = vcmp.ge.s32.totalorder %v195, 0
        %vm197 = vcmp.lt.s32.totalorder %v195, 256
        %vm198 = vmand %vm196, %vm197
        %199 = vst.msk [vmem:[%s150] sm:$0x3] %vm198, %v193
        %s200 = sand.u32 %s68, 1
        %s201 = scalar_lea.sflag [#allocation4], %s200
        %s202 = sand.u32 %s68, 1
        %s203 = smul.addr %s202, 2
        %s204 = scalar_lea.vmem [#allocation5], %s203
        // Predicated region
        $region29: #{tpu_custom_call.1} parent=23 // pred_check
          %p205 = pneg %p78
        $region30: #{tpu_custom_call.1} parent=23 // pred_check_branch
          %207 = sbr.rel (%p205) target = $region32
        $region31: #{tpu_custom_call.1} parent=23 // pred_region
          %s208 = smul.u32 2, %s23
          %s210 = ssub.s32 32, 32
          %211 = vsyncadd %s201, %s210
          %s212 = smul.addr %s22, 2
          %s213 = sadd.s32 %s208, %s212
          %s214 = smul.addr %s213, 16
          %s215 = scalar_lea.hbm %s1, %s214
          %s217 = sshll.u32 %s204, 4
          %s218 = int_to_ptr.vmem [resolvable:$true] %s217
          %220 = dma.vmem_to_hbm [thread:$0]  %s218, 32, %s215, %s201
        $region32: #{tpu_custom_call.1} parent=23 // pred_fallthru
          _
      $region24: #{tpu_custom_call.1} parent=5 // pred_fallthru
        _
      %p221 = scmp.le.s32.totalorder 2, %s13
      // Predicated region
      $region33: #{tpu_custom_call.1} parent=5 // pred_check
        %p222 = pneg %p221
      $region34: #{tpu_custom_call.1} parent=5 // pred_check_branch
        %224 = sbr.rel (%p222) target = $region36
      $region35: #{tpu_custom_call.1} parent=5 // pred_region
        %s225 = ssub.s32 %s13, 2
        // Predicated region
        $region37: #{tpu_custom_call.1} parent=35 // pred_check
          %p226 = pneg %p84
        $region38: #{tpu_custom_call.1} parent=35 // pred_check_branch
          %228 = sbr.rel (%p226) target = $region40
        $region39: #{tpu_custom_call.1} parent=35 // pred_region
          %s229 = sand.u32 %s69, 1
          %s230 = scalar_lea.sflag [#allocation4], %s229
          %s231 = sand.u32 %s69, 1
          %s232 = smul.addr %s231, 2
          %s233 = scalar_lea.vmem [#allocation5], %s232
          %234 = dma.done %s230, 32
        $region40: #{tpu_custom_call.1} parent=35 // pred_fallthru
          _
      $region36: #{tpu_custom_call.1} parent=5 // pred_fallthru
        _
    $region6: #{tpu_custom_call.1} parent=1 // loop_footer
      %s17 = sadd.s32 1, %s13
    $region7: #{tpu_custom_call.1} parent=1 // loop_footer_branch
      %12 = sbr.rel target = $region3
    $region8: #{tpu_custom_call.1} parent=1 // loop_exit
      _
    %235 = vsyncpa [#allocation3], 1
    %s236 = scalar_lea.sflag [#allocation3], 1
    %237 = vsyncpa %s236, 1
    %238 = vsyncpa [#allocation4], 1
    %s239 = scalar_lea.sflag [#allocation4], 1
    %240 = vsyncpa %s239, 1

</llo_original>
